<compile_context>
chip_gen: v7x
topology: tpu7x:2x2x1
jax: 0.10.0
libtpu: 0.0.40
codegen_flags: <defaults>
</compile_context>

<pallas_src>
import functools

import jax
import jax.numpy as jnp
from jax.experimental import pallas as pl
from jax.experimental.pallas import tpu as pltpu


def _round_up(x: int, m: int) -> int:
    return ((x + m - 1) // m) * m


def _convbnrelu_mm_kernel(x_ref, w_ref, scale_ref, shift_ref, o_ref, acc_ref,
                          *, apply_relu: bool):
    """One (TM, TN) output tile of  relu(patches @ w * scale + shift)."""
    k = pl.program_id(2)

    @pl.when(k == 0)
    def _():
        acc_ref[...] = jnp.zeros_like(acc_ref)

    acc_ref[...] += jnp.dot(x_ref[...], w_ref[...],
                            preferred_element_type=jnp.float32)

    @pl.when(k == pl.num_programs(2) - 1)
    def _():
        y = acc_ref[...] * scale_ref[...] + shift_ref[...]
        if apply_relu:
            y = jnp.maximum(y, 0.0)
        o_ref[...] = y.astype(o_ref.dtype)


def _im2col_nchw(x, kh, kw, stride, padding, dilation, h_out, w_out):
    """NCHW -> (N*H_out*W_out, C*kh*kw) patches, channel-major / spatial-minor,
    matching a PyTorch OIHW weight flattened as weight.reshape(OC, -1)."""
    n, c, _, _ = x.shape
    xp = jnp.pad(x, ((0, 0), (0, 0), (padding, padding), (padding, padding)))
    cols = []
    for i in range(kh):
        for j in range(kw):
            cols.append(
                xp[:, :,
                   i * dilation:i * dilation + (h_out - 1) * stride + 1:stride,
                   j * dilation:j * dilation + (w_out - 1) * stride + 1:stride])
    col = jnp.stack(cols, axis=2)                         # (N, C, kh*kw, Ho, Wo)
    col = col.reshape(n, c * kh * kw, h_out, w_out)
    col = col.transpose(0, 2, 3, 1).reshape(n * h_out * w_out, c * kh * kw)
    return col


def convbnrelu_forward(x, weight,
                       bn_gamma=None, bn_beta=None, bn_mean=None, bn_var=None,
                       *, stride=1, padding=0, dilation=1, groups=1,
                       conv_bias=None, bn=True, relu=True, eps=1e-5):
    """Forward pass of PyTorch `convbnrelu` (Conv2d + BatchNorm2d(eval) + ReLU).

    x:      (N, C, H, W) float32, NCHW (PyTorch layout)
    weight: (OC, C, kh, kw) float32, OIHW (PyTorch layout)
    """
    # TODO(synk): grouped convolution (groups > 1) is not implemented in the
    # Pallas im2col path; the module default (g=1) is supported.
    assert groups == 1, "groups > 1 not supported by the Pallas path"

    n, c, h, w = x.shape
    oc, ic, kh, kw = weight.shape
    assert ic == c, "channel mismatch"

    h_out = (h + 2 * padding - dilation * (kh - 1) - 1) // stride + 1
    w_out = (w + 2 * padding - dilation * (kw - 1) - 1) // stride + 1
    if n == 0 or h_out <= 0 or w_out <= 0:
        return jnp.zeros((n, oc, max(h_out, 0), max(w_out, 0)), x.dtype)

    # Fold BN (eval mode) + optional conv bias into per-channel scale / shift.
    if bn:
        scale = bn_gamma.astype(jnp.float32) / jnp.sqrt(bn_var.astype(jnp.float32) + eps)
        shift = bn_beta.astype(jnp.float32) - bn_mean.astype(jnp.float32) * scale
    else:
        scale = jnp.ones((oc,), jnp.float32)
        shift = jnp.zeros((oc,), jnp.float32)
    if conv_bias is not None:
        shift = shift + conv_bias.astype(jnp.float32) * scale

    # im2col (layout plumbing only) -> matmul operands.
    patches = _im2col_nchw(x.astype(jnp.float32), kh, kw, stride, padding,
                           dilation, h_out, w_out)          # (M, K)
    m, kdim = patches.shape
    wmat = weight.astype(jnp.float32).reshape(oc, kdim).T    # (K, OC)

    # Tile sizes: lane-dense 128-wide output, full-vreg K loads, modest TM so
    # double-buffered blocks stay far below v7x's scoped VMEM.
    TN = 128
    TM = min(256, _round_up(m, 8))
    TK = 512
    k_p = _round_up(kdim, 128)
    if k_p <= TK:
        TK = k_p
    else:
        k_p = _round_up(k_p, TK)
    m_p = _round_up(m, TM)
    n_p = _round_up(oc, TN)

    patches_p = jnp.pad(patches, ((0, m_p - m), (0, k_p - kdim)))
    w_p = jnp.pad(wmat, ((0, k_p - kdim), (0, n_p - oc)))
    scale_p = jnp.pad(scale, (0, n_p - oc)).reshape(1, n_p)
    shift_p = jnp.pad(shift, (0, n_p - oc)).reshape(1, n_p)

    grid = (m_p // TM, n_p // TN, k_p // TK)

    out = pl.pallas_call(
        functools.partial(_convbnrelu_mm_kernel, apply_relu=relu),
        out_shape=jax.ShapeDtypeStruct((m_p, n_p), jnp.float32),
        grid=grid,
        in_specs=[
            pl.BlockSpec((TM, TK), lambda i, j, k: (i, k)),   # patches
            pl.BlockSpec((TK, TN), lambda i, j, k: (k, j)),   # weight
            pl.BlockSpec((1, TN), lambda i, j, k: (0, j)),    # scale
            pl.BlockSpec((1, TN), lambda i, j, k: (0, j)),    # shift
        ],
        out_specs=pl.BlockSpec((TM, TN), lambda i, j, k: (i, j)),
        scratch_shapes=[pltpu.VMEM((TM, TN), jnp.float32)],
        compiler_params=pltpu.CompilerParams(
            dimension_semantics=("parallel", "parallel", "arbitrary")),
    )(patches_p, w_p, scale_p, shift_p)

    out = out[:m, :oc].reshape(n, h_out, w_out, oc).transpose(0, 3, 1, 2)
    return out.astype(x.dtype)


def _reference(x, weight, gamma, beta, mean, var, *, stride, padding, dilation,
               eps=1e-5):
    conv = jax.lax.conv_general_dilated(
        x, weight, window_strides=(stride, stride),
        padding=[(padding, padding), (padding, padding)],
        rhs_dilation=(dilation, dilation),
        dimension_numbers=("NCHW", "OIHW", "NCHW"),
        precision=jax.lax.Precision.HIGHEST)
    scale = gamma / jnp.sqrt(var + eps)
    shift = beta - mean * scale
    y = conv * scale.reshape(1, -1, 1, 1) + shift.reshape(1, -1, 1, 1)
    return jnp.maximum(y, 0.0)


if __name__ == "__main__":
    key = jax.random.PRNGKey(0)
    kx, kw1, kw2, kg, kb, km, kv = jax.random.split(key, 7)

    N, C, H, W = 2, 4, 16, 16
    OC = 8

    x = jax.random.normal(kx, (N, C, H, W), dtype=jnp.float32)
    gamma = 1.0 + 0.1 * jax.random.normal(kg, (OC,), dtype=jnp.float32)
    beta = 0.1 * jax.random.normal(kb, (OC,), dtype=jnp.float32)
    mean = 0.1 * jax.random.normal(km, (OC,), dtype=jnp.float32)
    var = jnp.abs(jax.random.normal(kv, (OC,), dtype=jnp.float32)) + 0.5

    # Config 1: 3x3 conv, stride 1, padding 1 (same spatial size).
    w3 = 0.1 * jax.random.normal(kw1, (OC, C, 3, 3), dtype=jnp.float32)
    y3 = convbnrelu_forward(x, w3, gamma, beta, mean, var,
                            stride=1, padding=1, dilation=1, groups=1)
    y3 = jax.block_until_ready(y3)
    ref3 = _reference(x, w3, gamma, beta, mean, var,
                      stride=1, padding=1, dilation=1)
    assert y3.shape == ref3.shape == (N, OC, H, W)
    assert jnp.allclose(y3, ref3, atol=5e-2, rtol=5e-2), "3x3 mismatch vs reference"

    # Config 2: 1x1 conv, stride 2, no padding (pointwise downsample).
    w1 = 0.2 * jax.random.normal(kw2, (OC, C, 1, 1), dtype=jnp.float32)
    y1 = convbnrelu_forward(x, w1, gamma, beta, mean, var,
                            stride=2, padding=0, dilation=1, groups=1)
    y1 = jax.block_until_ready(y1)
    ref1 = _reference(x, w1, gamma, beta, mean, var,
                      stride=2, padding=0, dilation=1)
    assert y1.shape == ref1.shape == (N, OC, H // 2, W // 2)
    assert jnp.allclose(y1, ref1, atol=5e-2, rtol=5e-2), "1x1 mismatch vs reference"

    print("KERNEL_OK")
</pallas_src>

<mosaic_0001>
module attributes {stable_mosaic.version = 11 : i64} {
  func.func @_convbnrelu_mm_kernel(%arg0: i32, %arg1: i32, %arg2: i32, %arg3: memref<256x128xf32, #tpu.memory_space<vmem>>, %arg4: memref<128x128xf32, #tpu.memory_space<vmem>>, %arg5: memref<1x128xf32, #tpu.memory_space<vmem>>, %arg6: memref<1x128xf32, #tpu.memory_space<vmem>>, %arg7: memref<256x128xf32, #tpu.memory_space<vmem>>, %arg8: memref<256x128xf32, #tpu.memory_space<vmem>>) attributes {dimension_semantics = [#tpu.dimension_semantics<parallel>, #tpu.dimension_semantics<parallel>, #tpu.dimension_semantics<arbitrary>], iteration_bounds = array<i64: 2, 1, 1>, scalar_prefetch = 0 : i64, scratch_operands = 1 : i64, tpu.core_type = #tpu.core_type<tc>, window_params = [{transform_indices = @transform_0, window_bounds = array<i64: 256, 128>}, {transform_indices = @transform_1, window_bounds = array<i64: 128, 128>}, {transform_indices = @transform_2, window_bounds = array<i64: 1, 128>}, {transform_indices = @transform_3, window_bounds = array<i64: 1, 128>}, {transform_indices = @transform_4, window_bounds = array<i64: 256, 128>}]} {
    %c0_i32 = arith.constant 0 : i32
    %0 = arith.cmpi eq, %arg2, %c0_i32 : i32
    %1 = arith.extui %0 : i1 to i32
    %c0_i32_0 = arith.constant 0 : i32
    %2 = arith.cmpi ne, %1, %c0_i32_0 : i32
    scf.if %2 {
      %cst_10 = arith.constant 0.000000e+00 : f32
      %12 = vector.broadcast %cst_10 : f32 to vector<256x128xf32>
      %c0_11 = arith.constant 0 : index
      %c0_12 = arith.constant 0 : index
      %13 = vector.load %arg8[%c0_11, %c0_12] : memref<256x128xf32, #tpu.memory_space<vmem>>, vector<256x128xf32>
      tpu.vector_store %arg8[%c0_11, %c0_12], %12 {strides = array<i32>} : memref<256x128xf32, #tpu.memory_space<vmem>>, vector<256x128xf32>,
    } else {
    }
    %c0 = arith.constant 0 : index
    %c0_1 = arith.constant 0 : index
    %3 = vector.load %arg8[%c0, %c0_1] : memref<256x128xf32, #tpu.memory_space<vmem>>, vector<256x128xf32>
    %c0_2 = arith.constant 0 : index
    %c0_3 = arith.constant 0 : index
    %4 = vector.load %arg3[%c0_2, %c0_3] : memref<256x128xf32, #tpu.memory_space<vmem>>, vector<256x128xf32>
    %c0_4 = arith.constant 0 : index
    %c0_5 = arith.constant 0 : index
    %5 = vector.load %arg4[%c0_4, %c0_5] : memref<128x128xf32, #tpu.memory_space<vmem>>, vector<128x128xf32>
    %cst = arith.constant dense<0.000000e+00> : vector<256x128xf32>
    %6 = tpu.matmul %4, %5, %cst {dimension_numbers = #tpu.dot_dimension_numbers<[1], [0], [0], [1], [0, 0, 1, 1], [], []>} : vector<256x128xf32>, vector<128x128xf32>, vector<256x128xf32> -> vector<256x128xf32>
    %7 = arith.addf %3, %6 : vector<256x128xf32>
    %c0_6 = arith.constant 0 : index
    %c0_7 = arith.constant 0 : index
    %8 = vector.load %arg8[%c0_6, %c0_7] : memref<256x128xf32, #tpu.memory_space<vmem>>, vector<256x128xf32>
    tpu.vector_store %arg8[%c0_6, %c0_7], %7 {strides = array<i32>} : memref<256x128xf32, #tpu.memory_space<vmem>>, vector<256x128xf32>,
    %c0_i32_8 = arith.constant 0 : i32
    %9 = arith.cmpi eq, %arg2, %c0_i32_8 : i32
    %10 = arith.extui %9 : i1 to i32
    %c0_i32_9 = arith.constant 0 : i32
    %11 = arith.cmpi ne, %10, %c0_i32_9 : i32
    scf.if %11 {
      %c0_10 = arith.constant 0 : index
      %c0_11 = arith.constant 0 : index
      %12 = vector.load %arg8[%c0_10, %c0_11] : memref<256x128xf32, #tpu.memory_space<vmem>>, vector<256x128xf32>
      %c0_12 = arith.constant 0 : index
      %c0_13 = arith.constant 0 : index
      %13 = vector.load %arg5[%c0_12, %c0_13] : memref<1x128xf32, #tpu.memory_space<vmem>>, vector<1x128xf32>
      %14 = vector.broadcast %13 : vector<1x128xf32> to vector<256x128xf32>
      %15 = arith.mulf %12, %14 : vector<256x128xf32>
      %c0_14 = arith.constant 0 : index
      %c0_15 = arith.constant 0 : index
      %16 = vector.load %arg6[%c0_14, %c0_15] : memref<1x128xf32, #tpu.memory_space<vmem>>, vector<1x128xf32>
      %17 = vector.broadcast %16 : vector<1x128xf32> to vector<256x128xf32>
      %18 = arith.addf %15, %17 : vector<256x128xf32>
      %cst_16 = arith.constant 0.000000e+00 : f32
      %19 = vector.broadcast %cst_16 : f32 to vector<256x128xf32>
      %20 = arith.maximumf %18, %19 : vector<256x128xf32>
      %c0_17 = arith.constant 0 : index
      %c0_18 = arith.constant 0 : index
      %21 = vector.load %arg7[%c0_17, %c0_18] : memref<256x128xf32, #tpu.memory_space<vmem>>, vector<256x128xf32>
      tpu.vector_store %arg7[%c0_17, %c0_18], %20 {strides = array<i32>} : memref<256x128xf32, #tpu.memory_space<vmem>>, vector<256x128xf32>,
    } else {
    }
    return
  }
  func.func @transform_0(%arg0: i32, %arg1: i32, %arg2: i32) -> (i32, i32) {
    %c0_i32 = arith.constant 0 : i32
    return %arg0, %arg2 : i32, i32
  }
  func.func @transform_1(%arg0: i32, %arg1: i32, %arg2: i32) -> (i32, i32) {
    %c0_i32 = arith.constant 0 : i32
    return %arg2, %arg1 : i32, i32
  }
  func.func @transform_2(%arg0: i32, %arg1: i32, %arg2: i32) -> (i32, i32) {
    %c0_i32 = arith.constant 0 : i32
    %c0_i32_0 = arith.constant 0 : i32
    return %c0_i32, %arg1 : i32, i32
  }
  func.func @transform_3(%arg0: i32, %arg1: i32, %arg2: i32) -> (i32, i32) {
    %c0_i32 = arith.constant 0 : i32
    %c0_i32_0 = arith.constant 0 : i32
    return %c0_i32, %arg1 : i32, i32
  }
  func.func @transform_4(%arg0: i32, %arg1: i32, %arg2: i32) -> (i32, i32) {
    %c0_i32 = arith.constant 0 : i32
    return %arg0, %arg1 : i32, i32
  }
}

</mosaic_0001>

<llo_original>
// kernel: tpu_custom_call.1
$region0: #{tpu_custom_call.1}
  #allocation0 [shape = 'u32[]', space=smem, size = 0x4, offset = 0x4, fixed_abs, tag = 'smem constant byte address 0x4 - core index']
  #allocation1 [shape = 'u32[144,128]{1,0:T(1,128)}', space=vmem, size = 0x12000, scoped, tag = 'internal scratch']
  #allocation2 [shape = 'f32[256,128]{1,0:T(8,128)}', space=vmem, size = 0x20000, scoped, tag = 'scratch operand']
  %s0 = inlined_call_operand.hbm [shape: f32[512,128], index: 0, kind: input, shape index: {}]
  %s1 = inlined_call_operand.hbm [shape: f32[128,128], index: 1, kind: input, shape index: {}]
  %s2 = inlined_call_operand.vmem [shape: f32[1,128], index: 2, kind: input, shape index: {}]
  %s3 = inlined_call_operand.vmem [shape: f32[1,128], index: 3, kind: input, shape index: {}]
  %s4 = inlined_call_operand.hbm [shape: f32[512,128], index: 4, kind: output, shape index: {}]
  %s5 = sld [smem:[#allocation0]]
  $region65: #{tpu_custom_call.1} parent=0
    _
  %s7 = ssub.s32 1, %s5
  %s8 = scalar_select 0, %s7, %s5
  $region1: #{tpu_custom_call.1} parent=0
    #allocation3 [shape = 'u8[262144]{0}', space=vmem, size = 0x40000, scoped, tag = 'input window, operand 0']
    #allocation4 [shape = 's32[2]{0}', space=sflag, size = 0x8, scoped, tag = 'scoped memory for tpu_custom_call.1']
    #allocation5 [shape = 's32[2]{0}', space=sflag, size = 0x8, scoped, tag = 'scoped memory for tpu_custom_call.1']
    #allocation6 [shape = 'u8[65536]{0}', space=vmem, size = 0x10000, scoped, tag = 'input window, operand 1, single buffered']
    #allocation7 [shape = 's32[1]{0}', space=sflag, size = 0x4, scoped, tag = 'scoped memory for tpu_custom_call.1']
    #allocation8 [shape = 'u8[262144]{0}', space=vmem, size = 0x40000, scoped, tag = 'output window, operand 0']
    %9 = vsyncpa [#allocation4], 0
    %s10 = scalar_lea.sflag [#allocation4], 1
    %11 = vsyncpa %s10, 0
    %12 = vsyncpa [#allocation7], 0
    %13 = vsyncpa [#allocation5], 0
    %s14 = scalar_lea.sflag [#allocation5], 1
    %15 = vsyncpa %s14, 0
    loop: start=0, step=1, limit=4
    $region2: #{tpu_custom_call.1} parent=1 // loop_pre_header
      _
    $region3: #{tpu_custom_call.1} parent=1 // loop_header
      %s17 = sphi 0, %s21
      %p18 = scmp.ge.s32.totalorder %s17, 4
      %s24 = sphi 0, %s43
      %s25 = sphi 0, %s39
      %s26 = sphi 0, %s35
      %s27 = sphi 0, %s24
      %s28 = sphi 0, %s25
      %s29 = sphi 0, %s26
      %s30 = sphi 0, %s27
      %s31 = sphi 0, %s28
      %s32 = sphi 0, %s29
      %s48 = sphi 0, %s50
      %s51 = sphi 0, %s48
      %s52 = sphi 0, %s51
      %s68 = sphi 0, %s52
      %s76 = sphi 0, %s78
      %s79 = sphi 0, %s76
      %s80 = sphi 0, %s79
      %s96 = sphi 0, %s80
      %s102 = sphi 0, %s104
      %s105 = sphi 0, %s102
      %s106 = sphi 0, %s105
      %s122 = sphi 0, %s106
      %s128 = sphi 0, %s130
      %s131 = sphi 0, %s128
      %s132 = sphi 0, %s131
      %s148 = sphi 0, %s132
      %s156 = sphi 0, %s158
      %s159 = sphi 0, %s156
      %s160 = sphi 0, %s159
      %s176 = sphi 0, %s160
    $region4: #{tpu_custom_call.1} parent=1 // loop_header_branch
      %20 = sbr.rel (%p18) target = $region8
    $region5: #{tpu_custom_call.1} parent=1 // loop_body
      %s22 = ssub.s32 %s17, 1
      %s23 = ssub.s32 %s17, 2
      %s33 = sadd.s32 1, %s26
      %p34 = scmp.ge.s32.totalorder %s33, 1
      %s35 = scalar_select %p34, 0, %s33
      %s36 = sadd.s32 1, %s25
      %s37 = scalar_select %p34, %s36, %s25
      %p38 = scmp.ge.s32.totalorder %s37, 1
      %s39 = scalar_select %p38, 0, %s37
      %s40 = sadd.s32 1, %s24
      %s41 = scalar_select %p38, %s40, %s24
      %p42 = scmp.ge.s32.totalorder %s41, 2
      %s43 = scalar_select %p42, 0, %s41
      %s44 = ssub.s32 %s24, %s43
      %s45 = ssub.s32 %s26, %s35
      %s46 = sor.u32 %s44, %s45
      %p47 = scmp.eq.s32.totalorder %s46, 0
      %s49 = sadd.s32 %s48, 1
      %s50 = scalar_select %p47, %s48, %s49
      %p53 = pneg %p47
      %p54 = scmp.eq.s32.totalorder %s17, 1
      %p55 = por %p53, %p54
      %p56 = scmp.ne.s32.totalorder %s48, %s51
      %p57 = scmp.eq.s32.totalorder %s17, 0
      %p58 = por %p56, %p57
      %p59 = scmp.ne.s32.totalorder %s48, %s51
      %p60 = scmp.eq.s32.totalorder %s22, 1
      %p61 = por %p59, %p60
      %p62 = scmp.ne.s32.totalorder %s51, %s52
      %p63 = scmp.eq.s32.totalorder %s22, 0
      %p64 = por %p62, %p63
      %p65 = scmp.ne.s32.totalorder %s51, %s52
      %p66 = scmp.eq.s32.totalorder %s23, 1
      %p67 = por %p65, %p66
      %p69 = scmp.ne.s32.totalorder %s52, %s68
      %p70 = scmp.eq.s32.totalorder %s23, 0
      %p71 = por %p69, %p70
      %s72 = ssub.s32 %s26, %s35
      %s73 = ssub.s32 %s25, %s39
      %s74 = sor.u32 %s72, %s73
      %p75 = scmp.eq.s32.totalorder %s74, 0
      %s77 = sadd.s32 %s76, 1
      %s78 = scalar_select %p75, %s76, %s77
      %p81 = pneg %p75
      %p82 = scmp.eq.s32.totalorder %s17, 1
      %p83 = por %p81, %p82
      %p84 = scmp.ne.s32.totalorder %s76, %s79
      %p85 = scmp.eq.s32.totalorder %s17, 0
      %p86 = por %p84, %p85
      %p87 = scmp.ne.s32.totalorder %s76, %s79
      %p88 = scmp.eq.s32.totalorder %s22, 1
      %p89 = por %p87, %p88
      %p90 = scmp.ne.s32.totalorder %s79, %s80
      %p91 = scmp.eq.s32.totalorder %s22, 0
      %p92 = por %p90, %p91
      %p93 = scmp.ne.s32.totalorder %s79, %s80
      %p94 = scmp.eq.s32.totalorder %s23, 1
      %p95 = por %p93, %p94
      %p97 = scmp.ne.s32.totalorder %s80, %s96
      %p98 = scmp.eq.s32.totalorder %s23, 0
      %p99 = por %p97, %p98
      %s100 = ssub.s32 %s25, %s39
      %p101 = scmp.eq.s32.totalorder %s100, 0
      %s103 = sadd.s32 %s102, 1
      %s104 = scalar_select %p101, %s102, %s103
      %p107 = pneg %p101
      %p108 = scmp.eq.s32.totalorder %s17, 1
      %p109 = por %p107, %p108
      %p110 = scmp.ne.s32.totalorder %s102, %s105
      %p111 = scmp.eq.s32.totalorder %s17, 0
      %p112 = por %p110, %p111
      %p113 = scmp.ne.s32.totalorder %s102, %s105
      %p114 = scmp.eq.s32.totalorder %s22, 1
      %p115 = por %p113, %p114
      %p116 = scmp.ne.s32.totalorder %s105, %s106
      %p117 = scmp.eq.s32.totalorder %s22, 0
      %p118 = por %p116, %p117
      %p119 = scmp.ne.s32.totalorder %s105, %s106
      %p120 = scmp.eq.s32.totalorder %s23, 1
      %p121 = por %p119, %p120
      %p123 = scmp.ne.s32.totalorder %s106, %s122
      %p124 = scmp.eq.s32.totalorder %s23, 0
      %p125 = por %p123, %p124
      %s126 = ssub.s32 %s25, %s39
      %p127 = scmp.eq.s32.totalorder %s126, 0
      %s129 = sadd.s32 %s128, 1
      %s130 = scalar_select %p127, %s128, %s129
      %p133 = pneg %p127
      %p134 = scmp.eq.s32.totalorder %s17, 1
      %p135 = por %p133, %p134
      %p136 = scmp.ne.s32.totalorder %s128, %s131
      %p137 = scmp.eq.s32.totalorder %s17, 0
      %p138 = por %p136, %p137
      %p139 = scmp.ne.s32.totalorder %s128, %s131
      %p140 = scmp.eq.s32.totalorder %s22, 1
      %p141 = por %p139, %p140
      %p142 = scmp.ne.s32.totalorder %s131, %s132
      %p143 = scmp.eq.s32.totalorder %s22, 0
      %p144 = por %p142, %p143
      %p145 = scmp.ne.s32.totalorder %s131, %s132
      %p146 = scmp.eq.s32.totalorder %s23, 1
      %p147 = por %p145, %p146
      %p149 = scmp.ne.s32.totalorder %s132, %s148
      %p150 = scmp.eq.s32.totalorder %s23, 0
      %p151 = por %p149, %p150
      %s152 = ssub.s32 %s24, %s43
      %s153 = ssub.s32 %s25, %s39
      %s154 = sor.u32 %s152, %s153
      %p155 = scmp.eq.s32.totalorder %s154, 0
      %s157 = sadd.s32 %s156, 1
      %s158 = scalar_select %p155, %s156, %s157
      %p161 = pneg %p155
      %p162 = scmp.eq.s32.totalorder %s17, 1
      %p163 = por %p161, %p162
      %p164 = scmp.ne.s32.totalorder %s156, %s159
      %p165 = scmp.eq.s32.totalorder %s17, 0
      %p166 = por %p164, %p165
      %p167 = scmp.ne.s32.totalorder %s156, %s159
      %p168 = scmp.eq.s32.totalorder %s22, 1
      %p169 = por %p167, %p168
      %p170 = scmp.ne.s32.totalorder %s159, %s160
      %p171 = scmp.eq.s32.totalorder %s22, 0
      %p172 = por %p170, %p171
      %p173 = scmp.ne.s32.totalorder %s159, %s160
      %p174 = scmp.eq.s32.totalorder %s23, 1
      %p175 = por %p173, %p174
      %p177 = scmp.ne.s32.totalorder %s160, %s176
      %p178 = scmp.eq.s32.totalorder %s23, 0
      %p179 = por %p177, %p178
      %p180 = scmp.le.s32.totalorder 1, %s17
      %p181 = scmp.lt.s32.totalorder %s17, 3
      %p182 = pnand %p180, %p181
      %p183 = pneg %p182
      // Predicated region
      $region9: #{tpu_custom_call.1} parent=5 // pred_check
        _
      $region10: #{tpu_custom_call.1} parent=5 // pred_check_branch
        %185 = sbr.rel (%p182) target = $region12
      $region11: #{tpu_custom_call.1} parent=5 // pred_region
        %s186 = ssub.s32 %s17, 1
        // Predicated region
        $region13: #{tpu_custom_call.1} parent=11 // pred_check
          %p187 = pneg %p92
        $region14: #{tpu_custom_call.1} parent=11 // pred_check_branch
          %189 = sbr.rel (%p187) target = $region16
        $region15: #{tpu_custom_call.1} parent=11 // pred_region
          %s190 = smul.u32 16, %s29
          %s192 = ssub.s32 2048, 2048
          %193 = vsyncadd [#allocation7], %s192
          %s194 = sadd.s32 %s28, %s190
          %s195 = smul.addr %s194, 128
          %s196 = scalar_lea.hbm %s1, %s195
          %s197 = sshll.u32 [#allocation6], 4
          %s198 = int_to_ptr.vmem [resolvable:$true] %s197
          %203 = dma.hbm_to_vmem [thread:$0]  %s196, 2048, %s198, [#allocation7], 128, 128, 8
        $region16: #{tpu_custom_call.1} parent=11 // pred_fallthru
          _
        // Predicated region
        $region17: #{tpu_custom_call.1} parent=11 // pred_check
          %p204 = pneg %p118
        $region18: #{tpu_custom_call.1} parent=11 // pred_check_branch
          %206 = sbr.rel (%p204) target = $region20
        $region19: #{tpu_custom_call.1} parent=11 // pred_region
          %p207 = scmp.lt.s32.totalorder %s28, 0
          %s208 = scalar_select %p207, %s28, 0
          %s209 = scalar_lea.vmem %s2, %s208
        $region20: #{tpu_custom_call.1} parent=11 // pred_fallthru
          _
        // Predicated region
        $region21: #{tpu_custom_call.1} parent=11 // pred_check
          %p210 = pneg %p144
        $region22: #{tpu_custom_call.1} parent=11 // pred_check_branch
          %212 = sbr.rel (%p210) target = $region24
        $region23: #{tpu_custom_call.1} parent=11 // pred_region
          %p213 = scmp.lt.s32.totalorder %s28, 0
          %s214 = scalar_select %p213, %s28, 0
          %s215 = scalar_lea.vmem %s3, %s214
        $region24: #{tpu_custom_call.1} parent=11 // pred_fallthru
          _
      $region12: #{tpu_custom_call.1} parent=5 // pred_fallthru
        _
      %p216 = scmp.lt.s32.totalorder %s17, 2
      // Predicated region
      $region25: #{tpu_custom_call.1} parent=5 // pred_check
        %p217 = pneg %p216
      $region26: #{tpu_custom_call.1} parent=5 // pred_check_branch
        %219 = sbr.rel (%p217) target = $region28
      $region27: #{tpu_custom_call.1} parent=5 // pred_region
        // Predicated region
        $region29: #{tpu_custom_call.1} parent=27 // pred_check
          %p220 = pneg %p58
        $region30: #{tpu_custom_call.1} parent=27 // pred_check_branch
          %222 = sbr.rel (%p220) target = $region32
        $region31: #{tpu_custom_call.1} parent=27 // pred_region
          %s223 = sand.u32 %s48, 1
          %s224 = scalar_lea.sflag [#allocation4], %s223
          %s225 = sand.u32 %s48, 1
          %s226 = smul.addr %s225, 256
          %s227 = scalar_lea.vmem [#allocation3], %s226
          %s228 = smul.u32 32, %s24
          %s230 = ssub.s32 4096, 4096
          %231 = vsyncadd %s224, %s230
          %s232 = sadd.s32 %s26, %s228
          %s233 = smul.addr %s232, 128
          %s234 = scalar_lea.hbm %s0, %s233
          %s235 = sshll.u32 %s227, 4
          %s236 = int_to_ptr.vmem [resolvable:$true] %s235
          %241 = dma.hbm_to_vmem [thread:$0]  %s234, 4096, %s236, %s224, 128, 128, 8
        $region32: #{tpu_custom_call.1} parent=27 // pred_fallthru
          _
      $region28: #{tpu_custom_call.1} parent=5 // pred_fallthru
        _
      %p242 = scmp.le.s32.totalorder 1, %s17
      %p243 = scmp.lt.s32.totalorder %s17, 3
      %p244 = pnand %p242, %p243
      %p245 = pneg %p244
      // Predicated region
      $region33: #{tpu_custom_call.1} parent=5 // pred_check
        _
      $region34: #{tpu_custom_call.1} parent=5 // pred_check_branch
        %247 = sbr.rel (%p244) target = $region36
      $region35: #{tpu_custom_call.1} parent=5 // pred_region
        %s248 = ssub.s32 %s17, 1
        %s249 = sand.u32 %s51, 1
        %s250 = scalar_lea.sflag [#allocation4], %s249
        %s251 = sand.u32 %s51, 1
        %s252 = smul.addr %s251, 256
        %s253 = scalar_lea.vmem [#allocation3], %s252
        // Predicated region
        $region37: #{tpu_custom_call.1} parent=35 // pred_check
          %p254 = pneg %p64
        $region38: #{tpu_custom_call.1} parent=35 // pred_check_branch
          %256 = sbr.rel (%p254) target = $region40
        $region39: #{tpu_custom_call.1} parent=35 // pred_region
          %257 = dma.done %s250, 4096
        $region40: #{tpu_custom_call.1} parent=35 // pred_fallthru
          _
        // Predicated region
        $region41: #{tpu_custom_call.1} parent=35 // pred_check
          %p258 = pneg %p92
        $region42: #{tpu_custom_call.1} parent=35 // pred_check_branch
          %260 = sbr.rel (%p258) target = $region44
        $region43: #{tpu_custom_call.1} parent=35 // pred_region
          %261 = dma.done [#allocation7], 2048
        $region44: #{tpu_custom_call.1} parent=35 // pred_fallthru
          _
        %s262 = sand.u32 %s51, 1
        %s263 = scalar_lea.sflag [#allocation4], %s262
        %s264 = sand.u32 %s51, 1
        %s265 = smul.addr %s264, 256
        %s266 = scalar_lea.vmem [#allocation3], %s265
        %p267 = pneg %p64
        %p268 = pneg %p61
        %p269 = pneg %p92
        %p270 = pneg %p89
        %p271 = scmp.lt.s32.totalorder %s28, 0
        %s272 = scalar_select %p271, %s28, 0
        %s273 = scalar_lea.vmem %s2, %s272
        %p274 = pneg %p118
        %p275 = pneg %p115
        %p276 = scmp.lt.s32.totalorder %s28, 0
        %s277 = scalar_select %p276, %s28, 0
        %s278 = scalar_lea.vmem %s3, %s277
        %p279 = pneg %p144
        %p280 = pneg %p141
        %p281 = pneg %p172
        %p282 = pneg %p169
        %s283 = sand.u32 %s159, 1
        %s284 = scalar_lea.sflag [#allocation5], %s283
        %s285 = sand.u32 %s159, 1
        %s286 = smul.addr %s285, 256
        %s287 = scalar_lea.vmem [#allocation8], %s286
        %s288 = smul.u32 32, %s27
        %s289 = smul.u32 16, %s29
        %p290 = scmp.lt.s32.totalorder %s28, 0
        %s291 = scalar_select %p290, %s28, 0
        %s292 = scalar_lea.vmem %s2, %s291
        %p293 = scmp.lt.s32.totalorder %s28, 0
        %s294 = scalar_select %p293, %s28, 0
        %s295 = scalar_lea.vmem %s3, %s294
        %s296 = smul.u32 32, %s27
        %p297 = scmp.eq.s32.totalorder %s29, 0
        // Predicated region
        $region45: #{tpu_custom_call.1} parent=35 // pred_check
          %p298 = pneg %p297
        $region46: #{tpu_custom_call.1} parent=35 // pred_check_branch
          %300 = sbr.rel (%p298) target = $region48
        $region47: #{tpu_custom_call.1} parent=35 // pred_region
          %301 = vst [vmem:[#allocation2] sm:$0xff] 0.0
          %302 = vst [vmem:[#allocation2 + $0x8] sm:$0xff] 0.0
          %303 = vst [vmem:[#allocation2 + $0x10] sm:$0xff] 0.0
          %304 = vst [vmem:[#allocation2 + $0x18] sm:$0xff] 0.0
          %305 = vst [vmem:[#allocation2 + $0x20] sm:$0xff] 0.0
          %306 = vst [vmem:[#allocation2 + $0x28] sm:$0xff] 0.0
          %307 = vst [vmem:[#allocation2 + $0x30] sm:$0xff] 0.0
          %308 = vst [vmem:[#allocation2 + $0x38] sm:$0xff] 0.0
          %309 = vst [vmem:[#allocation2 + $0x40] sm:$0xff] 0.0
          %310 = vst [vmem:[#allocation2 + $0x48] sm:$0xff] 0.0
          %311 = vst [vmem:[#allocation2 + $0x50] sm:$0xff] 0.0
          %312 = vst [vmem:[#allocation2 + $0x58] sm:$0xff] 0.0
          %313 = vst [vmem:[#allocation2 + $0x60] sm:$0xff] 0.0
          %314 = vst [vmem:[#allocation2 + $0x68] sm:$0xff] 0.0
          %315 = vst [vmem:[#allocation2 + $0x70] sm:$0xff] 0.0
          %316 = vst [vmem:[#allocation2 + $0x78] sm:$0xff] 0.0
          %317 = vst [vmem:[#allocation2 + $0x80] sm:$0xff] 0.0
          %318 = vst [vmem:[#allocation2 + $0x88] sm:$0xff] 0.0
          %319 = vst [vmem:[#allocation2 + $0x90] sm:$0xff] 0.0
          %320 = vst [vmem:[#allocation2 + $0x98] sm:$0xff] 0.0
          %321 = vst [vmem:[#allocation2 + $0xa0] sm:$0xff] 0.0
          %322 = vst [vmem:[#allocation2 + $0xa8] sm:$0xff] 0.0
          %323 = vst [vmem:[#allocation2 + $0xb0] sm:$0xff] 0.0
          %324 = vst [vmem:[#allocation2 + $0xb8] sm:$0xff] 0.0
          %325 = vst [vmem:[#allocation2 + $0xc0] sm:$0xff] 0.0
          %326 = vst [vmem:[#allocation2 + $0xc8] sm:$0xff] 0.0
          %327 = vst [vmem:[#allocation2 + $0xd0] sm:$0xff] 0.0
          %328 = vst [vmem:[#allocation2 + $0xd8] sm:$0xff] 0.0
          %329 = vst [vmem:[#allocation2 + $0xe0] sm:$0xff] 0.0
          %330 = vst [vmem:[#allocation2 + $0xe8] sm:$0xff] 0.0
          %331 = vst [vmem:[#allocation2 + $0xf0] sm:$0xff] 0.0
          %332 = vst [vmem:[#allocation2 + $0xf8] sm:$0xff] 0.0
        $region48: #{tpu_custom_call.1} parent=35 // pred_fallthru
          _
        %v333 = vld [vmem:[#allocation2] sm:$0xff]
        %v334 = vld [vmem:[#allocation2 + $0x8] sm:$0xff]
        %v335 = vld [vmem:[#allocation2 + $0x10] sm:$0xff]
        %v336 = vld [vmem:[#allocation2 + $0x18] sm:$0xff]
        %v337 = vld [vmem:[#allocation2 + $0x20] sm:$0xff]
        %v338 = vld [vmem:[#allocation2 + $0x28] sm:$0xff]
        %v339 = vld [vmem:[#allocation2 + $0x30] sm:$0xff]
        %v340 = vld [vmem:[#allocation2 + $0x38] sm:$0xff]
        %v341 = vld [vmem:[#allocation2 + $0x40] sm:$0xff]
        %v342 = vld [vmem:[#allocation2 + $0x48] sm:$0xff]
        %v343 = vld [vmem:[#allocation2 + $0x50] sm:$0xff]
        %v344 = vld [vmem:[#allocation2 + $0x58] sm:$0xff]
        %v345 = vld [vmem:[#allocation2 + $0x60] sm:$0xff]
        %v346 = vld [vmem:[#allocation2 + $0x68] sm:$0xff]
        %v347 = vld [vmem:[#allocation2 + $0x70] sm:$0xff]
        %v348 = vld [vmem:[#allocation2 + $0x78] sm:$0xff]
        %v349 = vld [vmem:[#allocation2 + $0x80] sm:$0xff]
        %v350 = vld [vmem:[#allocation2 + $0x88] sm:$0xff]
        %v351 = vld [vmem:[#allocation2 + $0x90] sm:$0xff]
        %v352 = vld [vmem:[#allocation2 + $0x98] sm:$0xff]
        %v353 = vld [vmem:[#allocation2 + $0xa0] sm:$0xff]
        %v354 = vld [vmem:[#allocation2 + $0xa8] sm:$0xff]
        %v355 = vld [vmem:[#allocation2 + $0xb0] sm:$0xff]
        %v356 = vld [vmem:[#allocation2 + $0xb8] sm:$0xff]
        %v357 = vld [vmem:[#allocation2 + $0xc0] sm:$0xff]
        %v358 = vld [vmem:[#allocation2 + $0xc8] sm:$0xff]
        %v359 = vld [vmem:[#allocation2 + $0xd0] sm:$0xff]
        %v360 = vld [vmem:[#allocation2 + $0xd8] sm:$0xff]
        %v361 = vld [vmem:[#allocation2 + $0xe0] sm:$0xff]
        %v362 = vld [vmem:[#allocation2 + $0xe8] sm:$0xff]
        %v363 = vld [vmem:[#allocation2 + $0xf0] sm:$0xff]
        %v364 = vld [vmem:[#allocation2 + $0xf8] sm:$0xff]
        %v365 = vld [vmem:[%s253] sm:$0xff]
        %v366 = vld [vmem:[%s253 + $0x8] sm:$0xff]
        %v367 = vld [vmem:[%s253 + $0x10] sm:$0xff]
        %v368 = vld [vmem:[%s253 + $0x18] sm:$0xff]
        %v369 = vld [vmem:[%s253 + $0x20] sm:$0xff]
        %v370 = vld [vmem:[%s253 + $0x28] sm:$0xff]
        %v371 = vld [vmem:[%s253 + $0x30] sm:$0xff]
        %v372 = vld [vmem:[%s253 + $0x38] sm:$0xff]
        %v373 = vld [vmem:[%s253 + $0x40] sm:$0xff]
        %v374 = vld [vmem:[%s253 + $0x48] sm:$0xff]
        %v375 = vld [vmem:[%s253 + $0x50] sm:$0xff]
        %v376 = vld [vmem:[%s253 + $0x58] sm:$0xff]
        %v377 = vld [vmem:[%s253 + $0x60] sm:$0xff]
        %v378 = vld [vmem:[%s253 + $0x68] sm:$0xff]
        %v379 = vld [vmem:[%s253 + $0x70] sm:$0xff]
        %v380 = vld [vmem:[%s253 + $0x78] sm:$0xff]
        %v381 = vld [vmem:[%s253 + $0x80] sm:$0xff]
        %v382 = vld [vmem:[%s253 + $0x88] sm:$0xff]
        %v383 = vld [vmem:[%s253 + $0x90] sm:$0xff]
        %v384 = vld [vmem:[%s253 + $0x98] sm:$0xff]
        %v385 = vld [vmem:[%s253 + $0xa0] sm:$0xff]
        %v386 = vld [vmem:[%s253 + $0xa8] sm:$0xff]
        %v387 = vld [vmem:[%s253 + $0xb0] sm:$0xff]
        %v388 = vld [vmem:[%s253 + $0xb8] sm:$0xff]
        %v389 = vld [vmem:[%s253 + $0xc0] sm:$0xff]
        %v390 = vld [vmem:[%s253 + $0xc8] sm:$0xff]
        %v391 = vld [vmem:[%s253 + $0xd0] sm:$0xff]
        %v392 = vld [vmem:[%s253 + $0xd8] sm:$0xff]
        %v393 = vld [vmem:[%s253 + $0xe0] sm:$0xff]
        %v394 = vld [vmem:[%s253 + $0xe8] sm:$0xff]
        %v395 = vld [vmem:[%s253 + $0xf0] sm:$0xff]
        %v396 = vld [vmem:[%s253 + $0xf8] sm:$0xff]
        %v397 = vld [vmem:[#allocation6] sm:$0xff]
        %v398 = vld [vmem:[#allocation6 + $0x8] sm:$0xff]
        %v399 = vld [vmem:[#allocation6 + $0x10] sm:$0xff]
        %v400 = vld [vmem:[#allocation6 + $0x18] sm:$0xff]
        %v401 = vld [vmem:[#allocation6 + $0x20] sm:$0xff]
        %v402 = vld [vmem:[#allocation6 + $0x28] sm:$0xff]
        %v403 = vld [vmem:[#allocation6 + $0x30] sm:$0xff]
        %v404 = vld [vmem:[#allocation6 + $0x38] sm:$0xff]
        %v405 = vld [vmem:[#allocation6 + $0x40] sm:$0xff]
        %v406 = vld [vmem:[#allocation6 + $0x48] sm:$0xff]
        %v407 = vld [vmem:[#allocation6 + $0x50] sm:$0xff]
        %v408 = vld [vmem:[#allocation6 + $0x58] sm:$0xff]
        %v409 = vld [vmem:[#allocation6 + $0x60] sm:$0xff]
        %v410 = vld [vmem:[#allocation6 + $0x68] sm:$0xff]
        %v411 = vld [vmem:[#allocation6 + $0x70] sm:$0xff]
        %v412 = vld [vmem:[#allocation6 + $0x78] sm:$0xff]
        %413 = vmatprep.subr.mxu0 0.0
        %414 = vmatpush1.msra.mxu0 %v397
        %415 = vmatprep.subr.mxu0 0.0
        %416 = vmatpush1.msra.mxu0 %v398
        %417 = vmatprep.subr.mxu0 0.0
        %418 = vmatpush1.msra.mxu0 %v399
        %419 = vmatprep.subr.mxu0 0.0
        %420 = vmatpush1.msra.mxu0 %v400
        %421 = vmatprep.subr.mxu0 0.0
        %422 = vmatpush1.msra.mxu0 %v401
        %423 = vmatprep.subr.mxu0 0.0
        %424 = vmatpush1.msra.mxu0 %v402
        %425 = vmatprep.subr.mxu0 0.0
        %426 = vmatpush1.msra.mxu0 %v403
        %427 = vmatprep.subr.mxu0 0.0
        %428 = vmatpush1.msra.mxu0 %v404
        %429 = vmatprep.subr.mxu0 0.0
        %430 = vmatpush1.msra.mxu0 %v405
        %431 = vmatprep.subr.mxu0 0.0
        %432 = vmatpush1.msra.mxu0 %v406
        %433 = vmatprep.subr.mxu0 0.0
        %434 = vmatpush1.msra.mxu0 %v407
        %435 = vmatprep.subr.mxu0 0.0
        %436 = vmatpush1.msra.mxu0 %v408
        %437 = vmatprep.subr.mxu0 0.0
        %438 = vmatpush1.msra.mxu0 %v409
        %439 = vmatprep.subr.mxu0 0.0
        %440 = vmatpush1.msra.mxu0 %v410
        %441 = vmatprep.subr.mxu0 0.0
        %442 = vmatpush1.msra.mxu0 %v411
        %443 = vmatprep.subr.mxu0 0.0
        %444 = vmatpush1.msra.mxu0 %v412
        %445 = vmatprep.subr.mxu0 0.0
        %446 = vmatpush1.msra.mxu0 0.0
        %447 = vmatprep.subr.mxu0 0.0
        %448 = vmatpush1.msra.mxu0 0.0
        %449 = vmatprep.subr.mxu0 0.0
        %450 = vmatpush1.msra.mxu0 0.0
        %451 = vmatprep.subr.mxu0 0.0
        %452 = vmatpush1.msra.mxu0 0.0
        %453 = vmatprep.subr.mxu0 0.0
        %454 = vmatpush1.msra.mxu0 0.0
        %455 = vmatprep.subr.mxu0 0.0
        %456 = vmatpush1.msra.mxu0 0.0
        %457 = vmatprep.subr.mxu0 0.0
        %458 = vmatpush1.msra.mxu0 0.0
        %459 = vmatprep.subr.mxu0 0.0
        %460 = vmatpush1.msra.mxu0 0.0
        %461 = vmatprep.subr.mxu0 0.0
        %462 = vmatpush1.msra.mxu0 0.0
        %463 = vmatprep.subr.mxu0 0.0
        %464 = vmatpush1.msra.mxu0 0.0
        %465 = vmatprep.subr.mxu0 0.0
        %466 = vmatpush1.msra.mxu0 0.0
        %467 = vmatprep.subr.mxu0 0.0
        %468 = vmatpush1.msra.mxu0 0.0
        %469 = vmatprep.subr.mxu0 0.0
        %470 = vmatpush1.msra.mxu0 0.0
        %471 = vmatprep.subr.mxu0 0.0
        %472 = vmatpush1.msra.mxu0 0.0
        %473 = vmatprep.subr.mxu0 0.0
        %474 = vmatpush1.msra.mxu0 0.0
        %475 = vmatprep.subr.mxu0 0.0
        %476 = vmatpush1.msra.mxu0 0.0
        %477 = vmatprep.mubr.f32.mxu0 0.0
        %478 = vmatmul.mubr.f32.gmra.mrb[0].mxu0 %v365
        %v479 = vpop.f32.mrb[0].mxu0
        %v480 = vadd.f32 0.0, %v479
        %v481 = vpop.f32.mrb[0].mxu0
        %482 = vmatprep.mubr.f32.mxu0 0.0
        %483 = vmatmul.mubr.f32.gmra.mrb[0].mxu0 %v366
        %v484 = vpop.f32.mrb[0].mxu0
        %v485 = vadd.f32 0.0, %v484
        %v486 = vpop.f32.mrb[0].mxu0
        %487 = vmatprep.mubr.f32.mxu0 0.0
        %488 = vmatmul.mubr.f32.gmra.mrb[0].mxu0 %v367
        %v489 = vpop.f32.mrb[0].mxu0
        %v490 = vadd.f32 0.0, %v489
        %v491 = vpop.f32.mrb[0].mxu0
        %492 = vmatprep.mubr.f32.mxu0 0.0
        %493 = vmatmul.mubr.f32.gmra.mrb[0].mxu0 %v368
        %v494 = vpop.f32.mrb[0].mxu0
        %v495 = vadd.f32 0.0, %v494
        %v496 = vpop.f32.mrb[0].mxu0
        %497 = vmatprep.mubr.f32.mxu0 0.0
        %498 = vmatmul.mubr.f32.gmra.mrb[0].mxu0 %v369
        %v499 = vpop.f32.mrb[0].mxu0
        %v500 = vadd.f32 0.0, %v499
        %v501 = vpop.f32.mrb[0].mxu0
        %502 = vmatprep.mubr.f32.mxu0 0.0
        %503 = vmatmul.mubr.f32.gmra.mrb[0].mxu0 %v370
        %v504 = vpop.f32.mrb[0].mxu0
        %v505 = vadd.f32 0.0, %v504
        %v506 = vpop.f32.mrb[0].mxu0
        %507 = vmatprep.mubr.f32.mxu0 0.0
        %508 = vmatmul.mubr.f32.gmra.mrb[0].mxu0 %v371
        %v509 = vpop.f32.mrb[0].mxu0
        %v510 = vadd.f32 0.0, %v509
        %v511 = vpop.f32.mrb[0].mxu0
        %512 = vmatprep.mubr.f32.mxu0 0.0
        %513 = vmatmul.mubr.f32.gmra.mrb[0].mxu0 %v372
        %v514 = vpop.f32.mrb[0].mxu0
        %v515 = vadd.f32 0.0, %v514
        %v516 = vpop.f32.mrb[0].mxu0
        %517 = vmatprep.mubr.f32.mxu0 0.0
        %518 = vmatmul.mubr.f32.gmra.mrb[0].mxu0 %v373
        %v519 = vpop.f32.mrb[0].mxu0
        %v520 = vadd.f32 0.0, %v519
        %v521 = vpop.f32.mrb[0].mxu0
        %522 = vmatprep.mubr.f32.mxu0 0.0
        %523 = vmatmul.mubr.f32.gmra.mrb[0].mxu0 %v374
        %v524 = vpop.f32.mrb[0].mxu0
        %v525 = vadd.f32 0.0, %v524
        %v526 = vpop.f32.mrb[0].mxu0
        %527 = vmatprep.mubr.f32.mxu0 0.0
        %528 = vmatmul.mubr.f32.gmra.mrb[0].mxu0 %v375
        %v529 = vpop.f32.mrb[0].mxu0
        %v530 = vadd.f32 0.0, %v529
        %v531 = vpop.f32.mrb[0].mxu0
        %532 = vmatprep.mubr.f32.mxu0 0.0
        %533 = vmatmul.mubr.f32.gmra.mrb[0].mxu0 %v376
        %v534 = vpop.f32.mrb[0].mxu0
        %v535 = vadd.f32 0.0, %v534
        %v536 = vpop.f32.mrb[0].mxu0
        %537 = vmatprep.mubr.f32.mxu0 0.0
        %538 = vmatmul.mubr.f32.gmra.mrb[0].mxu0 %v377
        %v539 = vpop.f32.mrb[0].mxu0
        %v540 = vadd.f32 0.0, %v539
        %v541 = vpop.f32.mrb[0].mxu0
        %542 = vmatprep.mubr.f32.mxu0 0.0
        %543 = vmatmul.mubr.f32.gmra.mrb[0].mxu0 %v378
        %v544 = vpop.f32.mrb[0].mxu0
        %v545 = vadd.f32 0.0, %v544
        %v546 = vpop.f32.mrb[0].mxu0
        %547 = vmatprep.mubr.f32.mxu0 0.0
        %548 = vmatmul.mubr.f32.gmra.mrb[0].mxu0 %v379
        %v549 = vpop.f32.mrb[0].mxu0
        %v550 = vadd.f32 0.0, %v549
        %v551 = vpop.f32.mrb[0].mxu0
        %552 = vmatprep.mubr.f32.mxu0 0.0
        %553 = vmatmul.mubr.f32.gmra.mrb[0].mxu0 %v380
        %v554 = vpop.f32.mrb[0].mxu0
        %v555 = vadd.f32 0.0, %v554
        %v556 = vpop.f32.mrb[0].mxu0
        %557 = vmatprep.mubr.f32.mxu0 0.0
        %558 = vmatmul.mubr.f32.gmra.mrb[0].mxu0 %v381
        %v559 = vpop.f32.mrb[0].mxu0
        %v560 = vadd.f32 0.0, %v559
        %v561 = vpop.f32.mrb[0].mxu0
        %562 = vmatprep.mubr.f32.mxu0 0.0
        %563 = vmatmul.mubr.f32.gmra.mrb[0].mxu0 %v382
        %v564 = vpop.f32.mrb[0].mxu0
        %v565 = vadd.f32 0.0, %v564
        %v566 = vpop.f32.mrb[0].mxu0
        %567 = vmatprep.mubr.f32.mxu0 0.0
        %568 = vmatmul.mubr.f32.gmra.mrb[0].mxu0 %v383
        %v569 = vpop.f32.mrb[0].mxu0
        %v570 = vadd.f32 0.0, %v569
        %v571 = vpop.f32.mrb[0].mxu0
        %572 = vmatprep.mubr.f32.mxu0 0.0
        %573 = vmatmul.mubr.f32.gmra.mrb[0].mxu0 %v384
        %v574 = vpop.f32.mrb[0].mxu0
        %v575 = vadd.f32 0.0, %v574
        %v576 = vpop.f32.mrb[0].mxu0
        %577 = vmatprep.mubr.f32.mxu0 0.0
        %578 = vmatmul.mubr.f32.gmra.mrb[0].mxu0 %v385
        %v579 = vpop.f32.mrb[0].mxu0
        %v580 = vadd.f32 0.0, %v579
        %v581 = vpop.f32.mrb[0].mxu0
        %582 = vmatprep.mubr.f32.mxu0 0.0
        %583 = vmatmul.mubr.f32.gmra.mrb[0].mxu0 %v386
        %v584 = vpop.f32.mrb[0].mxu0
        %v585 = vadd.f32 0.0, %v584
        %v586 = vpop.f32.mrb[0].mxu0
        %587 = vmatprep.mubr.f32.mxu0 0.0
        %588 = vmatmul.mubr.f32.gmra.mrb[0].mxu0 %v387
        %v589 = vpop.f32.mrb[0].mxu0
        %v590 = vadd.f32 0.0, %v589
        %v591 = vpop.f32.mrb[0].mxu0
        %592 = vmatprep.mubr.f32.mxu0 0.0
        %593 = vmatmul.mubr.f32.gmra.mrb[0].mxu0 %v388
        %v594 = vpop.f32.mrb[0].mxu0
        %v595 = vadd.f32 0.0, %v594
        %v596 = vpop.f32.mrb[0].mxu0
        %597 = vmatprep.mubr.f32.mxu0 0.0
        %598 = vmatmul.mubr.f32.gmra.mrb[0].mxu0 %v389
        %v599 = vpop.f32.mrb[0].mxu0
        %v600 = vadd.f32 0.0, %v599
        %v601 = vpop.f32.mrb[0].mxu0
        %602 = vmatprep.mubr.f32.mxu0 0.0
        %603 = vmatmul.mubr.f32.gmra.mrb[0].mxu0 %v390
        %v604 = vpop.f32.mrb[0].mxu0
        %v605 = vadd.f32 0.0, %v604
        %v606 = vpop.f32.mrb[0].mxu0
        %607 = vmatprep.mubr.f32.mxu0 0.0
        %608 = vmatmul.mubr.f32.gmra.mrb[0].mxu0 %v391
        %v609 = vpop.f32.mrb[0].mxu0
        %v610 = vadd.f32 0.0, %v609
        %v611 = vpop.f32.mrb[0].mxu0
        %612 = vmatprep.mubr.f32.mxu0 0.0
        %613 = vmatmul.mubr.f32.gmra.mrb[0].mxu0 %v392
        %v614 = vpop.f32.mrb[0].mxu0
        %v615 = vadd.f32 0.0, %v614
        %v616 = vpop.f32.mrb[0].mxu0
        %617 = vmatprep.mubr.f32.mxu0 0.0
        %618 = vmatmul.mubr.f32.gmra.mrb[0].mxu0 %v393
        %v619 = vpop.f32.mrb[0].mxu0
        %v620 = vadd.f32 0.0, %v619
        %v621 = vpop.f32.mrb[0].mxu0
        %622 = vmatprep.mubr.f32.mxu0 0.0
        %623 = vmatmul.mubr.f32.gmra.mrb[0].mxu0 %v394
        %v624 = vpop.f32.mrb[0].mxu0
        %v625 = vadd.f32 0.0, %v624
        %v626 = vpop.f32.mrb[0].mxu0
        %627 = vmatprep.mubr.f32.mxu0 0.0
        %628 = vmatmul.mubr.f32.gmra.mrb[0].mxu0 %v395
        %v629 = vpop.f32.mrb[0].mxu0
        %v630 = vadd.f32 0.0, %v629
        %v631 = vpop.f32.mrb[0].mxu0
        %632 = vmatprep.mubr.f32.mxu0 0.0
        %633 = vmatmul.mubr.f32.gmra.mrb[0].mxu0 %v396
        %v634 = vpop.f32.mrb[0].mxu0
        %v635 = vadd.f32 0.0, %v634
        %v636 = vpop.f32.mrb[0].mxu0
        %637 = vdwg.mxu0
        %v638 = vadd.f32 %v333, %v480
        %v639 = vadd.f32 %v334, %v485
        %v640 = vadd.f32 %v335, %v490
        %v641 = vadd.f32 %v336, %v495
        %v642 = vadd.f32 %v337, %v500
        %v643 = vadd.f32 %v338, %v505
        %v644 = vadd.f32 %v339, %v510
        %v645 = vadd.f32 %v340, %v515
        %v646 = vadd.f32 %v341, %v520
        %v647 = vadd.f32 %v342, %v525
        %v648 = vadd.f32 %v343, %v530
        %v649 = vadd.f32 %v344, %v535
        %v650 = vadd.f32 %v345, %v540
        %v651 = vadd.f32 %v346, %v545
        %v652 = vadd.f32 %v347, %v550
        %v653 = vadd.f32 %v348, %v555
        %v654 = vadd.f32 %v349, %v560
        %v655 = vadd.f32 %v350, %v565
        %v656 = vadd.f32 %v351, %v570
        %v657 = vadd.f32 %v352, %v575
        %v658 = vadd.f32 %v353, %v580
        %v659 = vadd.f32 %v354, %v585
        %v660 = vadd.f32 %v355, %v590
        %v661 = vadd.f32 %v356, %v595
        %v662 = vadd.f32 %v357, %v600
        %v663 = vadd.f32 %v358, %v605
        %v664 = vadd.f32 %v359, %v610
        %v665 = vadd.f32 %v360, %v615
        %v666 = vadd.f32 %v361, %v620
        %v667 = vadd.f32 %v362, %v625
        %v668 = vadd.f32 %v363, %v630
        %v669 = vadd.f32 %v364, %v635
        %670 = vst [vmem:[#allocation2] sm:$0xff] %v638
        %671 = vst [vmem:[#allocation2 + $0x8] sm:$0xff] %v639
        %672 = vst [vmem:[#allocation2 + $0x10] sm:$0xff] %v640
        %673 = vst [vmem:[#allocation2 + $0x18] sm:$0xff] %v641
        %674 = vst [vmem:[#allocation2 + $0x20] sm:$0xff] %v642
        %675 = vst [vmem:[#allocation2 + $0x28] sm:$0xff] %v643
        %676 = vst [vmem:[#allocation2 + $0x30] sm:$0xff] %v644
        %677 = vst [vmem:[#allocation2 + $0x38] sm:$0xff] %v645
        %678 = vst [vmem:[#allocation2 + $0x40] sm:$0xff] %v646
        %679 = vst [vmem:[#allocation2 + $0x48] sm:$0xff] %v647
        %680 = vst [vmem:[#allocation2 + $0x50] sm:$0xff] %v648
        %681 = vst [vmem:[#allocation2 + $0x58] sm:$0xff] %v649
        %682 = vst [vmem:[#allocation2 + $0x60] sm:$0xff] %v650
        %683 = vst [vmem:[#allocation2 + $0x68] sm:$0xff] %v651
        %684 = vst [vmem:[#allocation2 + $0x70] sm:$0xff] %v652
        %685 = vst [vmem:[#allocation2 + $0x78] sm:$0xff] %v653
        %686 = vst [vmem:[#allocation2 + $0x80] sm:$0xff] %v654
        %687 = vst [vmem:[#allocation2 + $0x88] sm:$0xff] %v655
        %688 = vst [vmem:[#allocation2 + $0x90] sm:$0xff] %v656
        %689 = vst [vmem:[#allocation2 + $0x98] sm:$0xff] %v657
        %690 = vst [vmem:[#allocation2 + $0xa0] sm:$0xff] %v658
        %691 = vst [vmem:[#allocation2 + $0xa8] sm:$0xff] %v659
        %692 = vst [vmem:[#allocation2 + $0xb0] sm:$0xff] %v660
        %693 = vst [vmem:[#allocation2 + $0xb8] sm:$0xff] %v661
        %694 = vst [vmem:[#allocation2 + $0xc0] sm:$0xff] %v662
        %695 = vst [vmem:[#allocation2 + $0xc8] sm:$0xff] %v663
        %696 = vst [vmem:[#allocation2 + $0xd0] sm:$0xff] %v664
        %697 = vst [vmem:[#allocation2 + $0xd8] sm:$0xff] %v665
        %698 = vst [vmem:[#allocation2 + $0xe0] sm:$0xff] %v666
        %699 = vst [vmem:[#allocation2 + $0xe8] sm:$0xff] %v667
        %700 = vst [vmem:[#allocation2 + $0xf0] sm:$0xff] %v668
        %701 = vst [vmem:[#allocation2 + $0xf8] sm:$0xff] %v669
        // Predicated region
        $region49: #{tpu_custom_call.1} parent=35 // pred_check
          %p702 = pneg %p297
        $region50: #{tpu_custom_call.1} parent=35 // pred_check_branch
          %704 = sbr.rel (%p702) target = $region52
        $region51: #{tpu_custom_call.1} parent=35 // pred_region
          %v705 = vld [vmem:[#allocation2] sm:$0xff]
          %v706 = vld [vmem:[#allocation2 + $0x8] sm:$0xff]
          %v707 = vld [vmem:[#allocation2 + $0x10] sm:$0xff]
          %v708 = vld [vmem:[#allocation2 + $0x18] sm:$0xff]
          %v709 = vld [vmem:[#allocation2 + $0x20] sm:$0xff]
          %v710 = vld [vmem:[#allocation2 + $0x28] sm:$0xff]
          %v711 = vld [vmem:[#allocation2 + $0x30] sm:$0xff]
          %v712 = vld [vmem:[#allocation2 + $0x38] sm:$0xff]
          %v713 = vld [vmem:[#allocation2 + $0x40] sm:$0xff]
          %v714 = vld [vmem:[#allocation2 + $0x48] sm:$0xff]
          %v715 = vld [vmem:[#allocation2 + $0x50] sm:$0xff]
          %v716 = vld [vmem:[#allocation2 + $0x58] sm:$0xff]
          %v717 = vld [vmem:[#allocation2 + $0x60] sm:$0xff]
          %v718 = vld [vmem:[#allocation2 + $0x68] sm:$0xff]
          %v719 = vld [vmem:[#allocation2 + $0x70] sm:$0xff]
          %v720 = vld [vmem:[#allocation2 + $0x78] sm:$0xff]
          %v721 = vld [vmem:[#allocation2 + $0x80] sm:$0xff]
          %v722 = vld [vmem:[#allocation2 + $0x88] sm:$0xff]
          %v723 = vld [vmem:[#allocation2 + $0x90] sm:$0xff]
          %v724 = vld [vmem:[#allocation2 + $0x98] sm:$0xff]
          %v725 = vld [vmem:[#allocation2 + $0xa0] sm:$0xff]
          %v726 = vld [vmem:[#allocation2 + $0xa8] sm:$0xff]
          %v727 = vld [vmem:[#allocation2 + $0xb0] sm:$0xff]
          %v728 = vld [vmem:[#allocation2 + $0xb8] sm:$0xff]
          %v729 = vld [vmem:[#allocation2 + $0xc0] sm:$0xff]
          %v730 = vld [vmem:[#allocation2 + $0xc8] sm:$0xff]
          %v731 = vld [vmem:[#allocation2 + $0xd0] sm:$0xff]
          %v732 = vld [vmem:[#allocation2 + $0xd8] sm:$0xff]
          %v733 = vld [vmem:[#allocation2 + $0xe0] sm:$0xff]
          %v734 = vld [vmem:[#allocation2 + $0xe8] sm:$0xff]
          %v735 = vld [vmem:[#allocation2 + $0xf0] sm:$0xff]
          %v736 = vld [vmem:[#allocation2 + $0xf8] sm:$0xff]
          %v737 = vld [vmem:[%s292] sm:$0x1]
          %v739 = vlaneseq
          %v740 = vshrl.u32 %v739, 7
          %v741 = vsub.s32 0, %v740
          %v742 = vrot.slane %v737, %v741
          %v744 = vmul.f32 %v705, %v742
          %v745 = vmul.f32 %v706, %v742
          %v746 = vmul.f32 %v707, %v742
          %v747 = vmul.f32 %v708, %v742
          %v748 = vmul.f32 %v709, %v742
          %v749 = vmul.f32 %v710, %v742
          %v750 = vmul.f32 %v711, %v742
          %v751 = vmul.f32 %v712, %v742
          %v752 = vmul.f32 %v713, %v742
          %v753 = vmul.f32 %v714, %v742
          %v754 = vmul.f32 %v715, %v742
          %v755 = vmul.f32 %v716, %v742
          %v756 = vmul.f32 %v717, %v742
          %v757 = vmul.f32 %v718, %v742
          %v758 = vmul.f32 %v719, %v742
          %v759 = vmul.f32 %v720, %v742
          %v760 = vmul.f32 %v721, %v742
          %v761 = vmul.f32 %v722, %v742
          %v762 = vmul.f32 %v723, %v742
          %v763 = vmul.f32 %v724, %v742
          %v764 = vmul.f32 %v725, %v742
          %v765 = vmul.f32 %v726, %v742
          %v766 = vmul.f32 %v727, %v742
          %v767 = vmul.f32 %v728, %v742
          %v768 = vmul.f32 %v729, %v742
          %v769 = vmul.f32 %v730, %v742
          %v770 = vmul.f32 %v731, %v742
          %v771 = vmul.f32 %v732, %v742
          %v772 = vmul.f32 %v733, %v742
          %v773 = vmul.f32 %v734, %v742
          %v774 = vmul.f32 %v735, %v742
          %v775 = vmul.f32 %v736, %v742
          %v776 = vld [vmem:[%s295] sm:$0x1]
          %v778 = vlaneseq
          %v779 = vshrl.u32 %v778, 7
          %v780 = vsub.s32 0, %v779
          %v781 = vrot.slane %v776, %v780
          %v783 = vadd.f32 %v744, %v781
          %v784 = vadd.f32 %v745, %v781
          %v785 = vadd.f32 %v746, %v781
          %v786 = vadd.f32 %v747, %v781
          %v787 = vadd.f32 %v748, %v781
          %v788 = vadd.f32 %v749, %v781
          %v789 = vadd.f32 %v750, %v781
          %v790 = vadd.f32 %v751, %v781
          %v791 = vadd.f32 %v752, %v781
          %v792 = vadd.f32 %v753, %v781
          %v793 = vadd.f32 %v754, %v781
          %v794 = vadd.f32 %v755, %v781
          %v795 = vadd.f32 %v756, %v781
          %v796 = vadd.f32 %v757, %v781
          %v797 = vadd.f32 %v758, %v781
          %v798 = vadd.f32 %v759, %v781
          %v799 = vadd.f32 %v760, %v781
          %v800 = vadd.f32 %v761, %v781
          %v801 = vadd.f32 %v762, %v781
          %v802 = vadd.f32 %v763, %v781
          %v803 = vadd.f32 %v764, %v781
          %v804 = vadd.f32 %v765, %v781
          %v805 = vadd.f32 %v766, %v781
          %v806 = vadd.f32 %v767, %v781
          %v807 = vadd.f32 %v768, %v781
          %v808 = vadd.f32 %v769, %v781
          %v809 = vadd.f32 %v770, %v781
          %v810 = vadd.f32 %v771, %v781
          %v811 = vadd.f32 %v772, %v781
          %v812 = vadd.f32 %v773, %v781
          %v813 = vadd.f32 %v774, %v781
          %v814 = vadd.f32 %v775, %v781
          %v815 = vmax.f32 %v783, 0.0
          %v816 = vmax.f32 %v784, 0.0
          %v817 = vmax.f32 %v785, 0.0
          %v818 = vmax.f32 %v786, 0.0
          %v819 = vmax.f32 %v787, 0.0
          %v820 = vmax.f32 %v788, 0.0
          %v821 = vmax.f32 %v789, 0.0
          %v822 = vmax.f32 %v790, 0.0
          %v823 = vmax.f32 %v791, 0.0
          %v824 = vmax.f32 %v792, 0.0
          %v825 = vmax.f32 %v793, 0.0
          %v826 = vmax.f32 %v794, 0.0
          %v827 = vmax.f32 %v795, 0.0
          %v828 = vmax.f32 %v796, 0.0
          %v829 = vmax.f32 %v797, 0.0
          %v830 = vmax.f32 %v798, 0.0
          %v831 = vmax.f32 %v799, 0.0
          %v832 = vmax.f32 %v800, 0.0
          %v833 = vmax.f32 %v801, 0.0
          %v834 = vmax.f32 %v802, 0.0
          %v835 = vmax.f32 %v803, 0.0
          %v836 = vmax.f32 %v804, 0.0
          %v837 = vmax.f32 %v805, 0.0
          %v838 = vmax.f32 %v806, 0.0
          %v839 = vmax.f32 %v807, 0.0
          %v840 = vmax.f32 %v808, 0.0
          %v841 = vmax.f32 %v809, 0.0
          %v842 = vmax.f32 %v810, 0.0
          %v843 = vmax.f32 %v811, 0.0
          %v844 = vmax.f32 %v812, 0.0
          %v845 = vmax.f32 %v813, 0.0
          %v846 = vmax.f32 %v814, 0.0
          %847 = vst [vmem:[%s287] sm:$0xff] %v815
          %848 = vst [vmem:[%s287 + $0x8] sm:$0xff] %v816
          %849 = vst [vmem:[%s287 + $0x10] sm:$0xff] %v817
          %850 = vst [vmem:[%s287 + $0x18] sm:$0xff] %v818
          %851 = vst [vmem:[%s287 + $0x20] sm:$0xff] %v819
          %852 = vst [vmem:[%s287 + $0x28] sm:$0xff] %v820
          %853 = vst [vmem:[%s287 + $0x30] sm:$0xff] %v821
          %854 = vst [vmem:[%s287 + $0x38] sm:$0xff] %v822
          %855 = vst [vmem:[%s287 + $0x40] sm:$0xff] %v823
          %856 = vst [vmem:[%s287 + $0x48] sm:$0xff] %v824
          %857 = vst [vmem:[%s287 + $0x50] sm:$0xff] %v825
          %858 = vst [vmem:[%s287 + $0x58] sm:$0xff] %v826
          %859 = vst [vmem:[%s287 + $0x60] sm:$0xff] %v827
          %860 = vst [vmem:[%s287 + $0x68] sm:$0xff] %v828
          %861 = vst [vmem:[%s287 + $0x70] sm:$0xff] %v829
          %862 = vst [vmem:[%s287 + $0x78] sm:$0xff] %v830
          %863 = vst [vmem:[%s287 + $0x80] sm:$0xff] %v831
          %864 = vst [vmem:[%s287 + $0x88] sm:$0xff] %v832
          %865 = vst [vmem:[%s287 + $0x90] sm:$0xff] %v833
          %866 = vst [vmem:[%s287 + $0x98] sm:$0xff] %v834
          %867 = vst [vmem:[%s287 + $0xa0] sm:$0xff] %v835
          %868 = vst [vmem:[%s287 + $0xa8] sm:$0xff] %v836
          %869 = vst [vmem:[%s287 + $0xb0] sm:$0xff] %v837
          %870 = vst [vmem:[%s287 + $0xb8] sm:$0xff] %v838
          %871 = vst [vmem:[%s287 + $0xc0] sm:$0xff] %v839
          %872 = vst [vmem:[%s287 + $0xc8] sm:$0xff] %v840
          %873 = vst [vmem:[%s287 + $0xd0] sm:$0xff] %v841
          %874 = vst [vmem:[%s287 + $0xd8] sm:$0xff] %v842
          %875 = vst [vmem:[%s287 + $0xe0] sm:$0xff] %v843
          %876 = vst [vmem:[%s287 + $0xe8] sm:$0xff] %v844
          %877 = vst [vmem:[%s287 + $0xf0] sm:$0xff] %v845
          %878 = vst [vmem:[%s287 + $0xf8] sm:$0xff] %v846
        $region52: #{tpu_custom_call.1} parent=35 // pred_fallthru
          _
        %s879 = sand.u32 %s159, 1
        %s880 = scalar_lea.sflag [#allocation5], %s879
        %s881 = sand.u32 %s159, 1
        %s882 = smul.addr %s881, 256
        %s883 = scalar_lea.vmem [#allocation8], %s882
        // Predicated region
        $region53: #{tpu_custom_call.1} parent=35 // pred_check
          %p884 = pneg %p169
        $region54: #{tpu_custom_call.1} parent=35 // pred_check_branch
          %886 = sbr.rel (%p884) target = $region56
        $region55: #{tpu_custom_call.1} parent=35 // pred_region
          %s887 = smul.u32 32, %s27
          %s889 = ssub.s32 4096, 4096
          %890 = vsyncadd %s880, %s889
          %s891 = sadd.s32 %s28, %s887
          %s892 = smul.addr %s891, 128
          %s893 = scalar_lea.hbm %s4, %s892
          %s894 = sshll.u32 %s883, 4
          %s895 = int_to_ptr.vmem [resolvable:$true] %s894
          %900 = dma.vmem_to_hbm [thread:$0]  %s895, 4096, %s893, %s880, 128, 128, 8
        $region56: #{tpu_custom_call.1} parent=35 // pred_fallthru
          _
      $region36: #{tpu_custom_call.1} parent=5 // pred_fallthru
        _
      %p901 = scmp.le.s32.totalorder 2, %s17
      // Predicated region
      $region57: #{tpu_custom_call.1} parent=5 // pred_check
        %p902 = pneg %p901
      $region58: #{tpu_custom_call.1} parent=5 // pred_check_branch
        %904 = sbr.rel (%p902) target = $region60
      $region59: #{tpu_custom_call.1} parent=5 // pred_region
        %s905 = ssub.s32 %s17, 2
        // Predicated region
        $region61: #{tpu_custom_call.1} parent=59 // pred_check
          %p906 = pneg %p175
        $region62: #{tpu_custom_call.1} parent=59 // pred_check_branch
          %908 = sbr.rel (%p906) target = $region64
        $region63: #{tpu_custom_call.1} parent=59 // pred_region
          %s909 = sand.u32 %s160, 1
          %s910 = scalar_lea.sflag [#allocation5], %s909
          %s911 = sand.u32 %s160, 1
          %s912 = smul.addr %s911, 256
          %s913 = scalar_lea.vmem [#allocation8], %s912
          %914 = dma.done %s910, 4096
        $region64: #{tpu_custom_call.1} parent=59 // pred_fallthru
          _
      $region60: #{tpu_custom_call.1} parent=5 // pred_fallthru
        _
    $region6: #{tpu_custom_call.1} parent=1 // loop_footer
      %s21 = sadd.s32 1, %s17
    $region7: #{tpu_custom_call.1} parent=1 // loop_footer_branch
      %16 = sbr.rel target = $region3
    $region8: #{tpu_custom_call.1} parent=1 // loop_exit
      _
    %915 = vsyncpa [#allocation4], 1
    %s916 = scalar_lea.sflag [#allocation4], 1
    %917 = vsyncpa %s916, 1
    %918 = vsyncpa [#allocation7], 1
    %919 = vsyncpa [#allocation5], 1
    %s920 = scalar_lea.sflag [#allocation5], 1
    %921 = vsyncpa %s920, 1

</llo_original>
